<compile_context>
chip_gen: v6e
topology: v6e:2x2x1
jax: 0.10.0
libtpu: 0.0.40
codegen_flags: <defaults>
</compile_context>

<pallas_src>
import numpy as np
import jax
import jax.numpy as jnp
from jax import lax
from jax.experimental import pallas as pl
from jax.experimental.pallas import tpu as pltpu


def _cdiv(a, b):
    return (a + b - 1) // b


def _round_up(x, m):
    return _cdiv(x, m) * m


def _vmem_capacity_bytes():
    """Physical VMEM per core; conservative (v7x = 64 MiB) fallback."""
    try:
        cap = int(getattr(pltpu.get_tpu_info(), "vmem_capacity_bytes", 0))
        if cap > 0:
            return cap
    except Exception:
        pass
    return 64 << 20


# ---------------------------------------------------------------------------
# Kernel 1: full feature axis per tile (used by the no-grid fast path and the
# batch-tiled 1-D grid).  b_ref (1,1) SMEM, x_ref (tb, D), w_ref (1, D),
# o_ref (tb, 1).
# ---------------------------------------------------------------------------
def _rowtile_kernel(b_ref, x_ref, w_ref, o_ref):
    x = x_ref[...].astype(jnp.float32)
    w = w_ref[...].astype(jnp.float32)
    logits = jnp.sum(x * w, axis=-1, keepdims=True) + b_ref[0, 0]
    o_ref[...] = jax.nn.sigmoid(logits).astype(o_ref.dtype)


# ---------------------------------------------------------------------------
# Kernel 2: 2-D grid (batch tiles x feature tiles) for very large D.
# Lane-dense (tb, 128) f32 accumulator; cross-lane reduce only in epilogue.
# ---------------------------------------------------------------------------
def _make_split_kernel(D, td):
    rem = D % td          # valid lanes in the (partial) last feature block
    n_groups = td // 128  # td is always a multiple of 128 on this path

    def kernel(b_ref, x_ref, w_ref, o_ref, acc_ref):
        k = pl.program_id(1)
        nk = pl.num_programs(1)

        @pl.when(k == 0)
        def _():
            acc_ref[...] = jnp.zeros_like(acc_ref)

        x = x_ref[...].astype(jnp.float32)
        w = w_ref[...].astype(jnp.float32)
        prod = x * w
        if rem:
            # x / w are NOT padded in HBM; the trailing feature block holds
            # garbage lanes -> mask the product (handles NaN garbage too).
            limit = jnp.where(k == nk - 1, rem, td)
            lane = lax.broadcasted_iota(jnp.int32, prod.shape, 1)
            prod = jnp.where(lane < limit, prod, 0.0)

        # Fold td lanes into 128 with pure VPU adds (layout-aligned slices,
        # no per-step XLU reduce, no narrow masked stores).
        part = prod[:, 0:128]
        for g in range(1, n_groups):
            part = part + prod[:, g * 128:(g + 1) * 128]
        acc_ref[...] += part

        @pl.when(k == nk - 1)
        def _():
            logits = jnp.sum(acc_ref[...], axis=-1, keepdims=True) + b_ref[0, 0]
            o_ref[...] = jax.nn.sigmoid(logits).astype(o_ref.dtype)

    return kernel


def node_forward(xs_nchw, w, b, *, block_b=512, block_d=8192,
                 fast_path_bytes=8 << 20):
    """SDT decision-node routing probability: sigmoid(flatten(xs) @ w + b).

    xs_nchw: (B, C, H, W) activations (any float dtype; math is f32 in-kernel)
    w:       (D, 1) or (D,) with D = C*H*W
    b:       scalar / (1,) bias
    returns: (B, 1) float32
    """
    B = int(xs_nchw.shape[0])
    D = int(np.prod(xs_nchw.shape[1:]))

    x = xs_nchw.reshape(B, D)                       # metadata-only reshape
    w_row = jnp.reshape(w, (1, D)).astype(x.dtype)  # lane-dense weight row
    bias = jnp.reshape(b, (1, 1)).astype(jnp.float32)

    isz = x.dtype.itemsize
    wsz = w_row.dtype.itemsize
    cap = _vmem_capacity_bytes()
    budget = min(max(16 << 20, int(cap * 0.7)), 100 << 20)

    out_shape = jax.ShapeDtypeStruct((B, 1), jnp.float32)
    bias_spec = pl.BlockSpec(memory_space=pltpu.MemorySpace.SMEM)
    vmem_spec = pl.BlockSpec(memory_space=pltpu.MemorySpace.VMEM)

    def _vmem_limit(need):
        return int(min(max(need + need // 2 + (4 << 20), 32 << 20),
                       int(cap * 0.85)))

    b8 = _round_up(B, 8)

    # ---------- fast path: one block, no grid, no pipeline machinery -------
    fast_need = b8 * D * isz + 8 * D * wsz + b8 * 128 * 4
    if fast_need <= min(fast_path_bytes, budget):
        return pl.pallas_call(
            _rowtile_kernel,
            out_shape=out_shape,
            in_specs=[bias_spec, vmem_spec, vmem_spec],
            out_specs=vmem_spec,
            compiler_params=pltpu.CompilerParams(
                vmem_limit_bytes=_vmem_limit(fast_need)),
            cost_estimate=pl.CostEstimate(
                flops=2 * B * D, transcendentals=2 * B,
                bytes_accessed=B * D * isz + D * wsz + 4 * B + 4),
        )(bias, x, w_row)

    # ---------- batch-tiled 1-D grid, full feature axis per tile -----------
    fixed = 2 * 8 * D * wsz                         # (1,D) weight, dbl-buffered
    per_row = 2 * D * isz + 2 * 128 * 4             # x dbl-buf + lane-padded out
    cap_rows = (budget - fixed) // per_row if budget > fixed else 0

    if D <= 128 or (D <= block_d and cap_rows >= min(B, 8)):
        if B <= 8:
            tb = B                                  # full-extent batch block
        else:
            # >= 2 batch tiles whenever possible (v7x dual-TC sharding).
            tb = max(8, min(block_b, (int(cap_rows) // 8) * 8,
                            _round_up(_cdiv(B, 2), 8)))
        nb = _cdiv(B, tb)                           # trailing block may be partial
        need = 2 * tb * D * isz + fixed + 2 * tb * 128 * 4
        return pl.pallas_call(
            _rowtile_kernel,
            out_shape=out_shape,
            grid_spec=pltpu.PrefetchScalarGridSpec(
                num_scalar_prefetch=0,
                grid=(nb,),
                in_specs=[bias_spec,
                          pl.BlockSpec((tb, D), lambda i: (i, 0)),
                          pl.BlockSpec((1, D), lambda i: (0, 0))],
                out_specs=pl.BlockSpec((tb, 1), lambda i: (i, 0)),
            ),
            compiler_params=pltpu.CompilerParams(
                dimension_semantics=("parallel",),
                vmem_limit_bytes=_vmem_limit(need)),
            cost_estimate=pl.CostEstimate(
                flops=2 * B * D, transcendentals=2 * B,
                bytes_accessed=B * D * isz + nb * D * wsz + 4 * B + 4),
        )(bias, x, w_row)

    # ---------- 2-D grid: split the (huge) feature / reduction axis --------
    if B <= 8:
        tb = B
    else:
        tb = max(8, min(128, block_b, (B // 8) * 8,
                        _round_up(_cdiv(B, 2), 8)))
    d128 = (D // 128) * 128                         # D > 128 on this path
    acc_out = 3 * tb * 128 * 4                      # dbl-buf out + accumulator
    per_col = 2 * tb * 128 * isz + 2 * 8 * 128 * wsz
    max_cols = max(1, (budget - acc_out) // per_col)
    td = 128 * max(1, min(int(max_cols), max(1, block_d // 128), d128 // 128))
    nb, nk = _cdiv(B, tb), _cdiv(D, td)
    need = 2 * tb * td * isz + 2 * 8 * td * wsz + acc_out

    return pl.pallas_call(
        _make_split_kernel(D, td),
        out_shape=out_shape,
        grid_spec=pltpu.PrefetchScalarGridSpec(
            num_scalar_prefetch=0,
            grid=(nb, nk),
            in_specs=[bias_spec,
                      pl.BlockSpec((tb, td), lambda i, k: (i, k)),
                      pl.BlockSpec((1, td), lambda i, k: (0, k))],
            out_specs=pl.BlockSpec((tb, 1), lambda i, k: (i, 0)),
            scratch_shapes=[pltpu.VMEM((tb, 128), jnp.float32)],
        ),
        compiler_params=pltpu.CompilerParams(
            dimension_semantics=("parallel", "arbitrary"),
            vmem_limit_bytes=_vmem_limit(need)),
        cost_estimate=pl.CostEstimate(
            flops=2 * B * D, transcendentals=2 * B,
            bytes_accessed=B * D * isz + nb * nk * td * wsz + 4 * B + 4),
    )(bias, x, w_row)


def _ref(xs, w, b):
    Bq = xs.shape[0]
    Dq = int(np.prod(xs.shape[1:]))
    xf = xs.reshape(Bq, Dq).astype(jnp.float32)
    wf = jnp.reshape(w, (1, Dq)).astype(jnp.float32)
    logits = jnp.sum(xf * wf, axis=-1, keepdims=True)
    return jax.nn.sigmoid(logits + jnp.reshape(b, ()).astype(jnp.float32))


if __name__ == "__main__":
    key = jax.random.PRNGKey(0)

    # Case 1: small conv-feature input -> no-grid fast path.
    B, C, H, W = 2, 4, 16, 16
    D = C * H * W
    kx, kw, kb, key = jax.random.split(key, 4)
    xs = jax.random.normal(kx, (B, C, H, W), dtype=jnp.float32)
    w = jax.random.normal(kw, (D, 1), dtype=jnp.float32) * 0.02
    b = jax.random.normal(kb, (1,), dtype=jnp.float32) * 0.02

    out = jax.block_until_ready(node_forward(xs, w, b))
    np.testing.assert_allclose(np.asarray(out), np.asarray(_ref(xs, w, b)),
                               rtol=1e-5, atol=1e-5)

    # Case 2: non-aligned shapes, batch-tiled grid (partial last batch block,
    # full feature axis, no padding copies).
    B2, C2, H2, W2 = 18, 3, 10, 11
    D2 = C2 * H2 * W2
    kx2, kw2, kb2, key = jax.random.split(key, 4)
    xs2 = jax.random.normal(kx2, (B2, C2, H2, W2), dtype=jnp.float32)
    w2 = jax.random.normal(kw2, (D2, 1), dtype=jnp.float32) * 0.02
    b2 = jax.random.normal(kb2, (1,), dtype=jnp.float32) * 0.02

    out2 = jax.block_until_ready(
        node_forward(xs2, w2, b2, block_b=8, fast_path_bytes=0))
    np.testing.assert_allclose(np.asarray(out2), np.asarray(_ref(xs2, w2, b2)),
                               rtol=1e-5, atol=1e-5)

    # Case 3: force the 2-D split-D path (lane-dense accumulator + in-kernel
    # masking of the partial last feature block).
    out3 = jax.block_until_ready(
        node_forward(xs2, w2, b2, block_d=128, fast_path_bytes=0))
    np.testing.assert_allclose(np.asarray(out3), np.asarray(_ref(xs2, w2, b2)),
                               rtol=1e-5, atol=1e-5)

    print("KERNEL_OK")
</pallas_src>

<mosaic_0001>
module attributes {stable_mosaic.version = 11 : i64} {
  func.func @_rowtile_kernel(%arg0: memref<1x1xf32, #tpu.memory_space<smem>>, %arg1: memref<2x1024xf32, #tpu.memory_space<vmem>>, %arg2: memref<1x1024xf32, #tpu.memory_space<vmem>>, %arg3: memref<2x1xf32, #tpu.memory_space<vmem>>) attributes {dimension_semantics = [], scalar_prefetch = 0 : i64, scratch_operands = 0 : i64, tpu.core_type = #tpu.core_type<tc>} {
    %c0 = arith.constant 0 : index
    %c0_0 = arith.constant 0 : index
    %0 = vector.load %arg1[%c0, %c0_0] : memref<2x1024xf32, #tpu.memory_space<vmem>>, vector<2x1024xf32>
    %c0_1 = arith.constant 0 : index
    %c0_2 = arith.constant 0 : index
    %1 = vector.load %arg2[%c0_1, %c0_2] : memref<1x1024xf32, #tpu.memory_space<vmem>>, vector<1x1024xf32>
    %2 = vector.broadcast %1 : vector<1x1024xf32> to vector<2x1024xf32>
    %3 = arith.mulf %0, %2 : vector<2x1024xf32>
    %cst = arith.constant dense<0.000000e+00> : vector<2xf32>
    %4 = vector.multi_reduction <add>, %3, %cst [1] : vector<2x1024xf32> to vector<2xf32>
    %5 = vector.shape_cast %4 : vector<2xf32> to vector<2x1xf32>
    %c0_3 = arith.constant 0 : index
    %c0_4 = arith.constant 0 : index
    %6 = memref.load %arg0[%c0_3, %c0_4] : memref<1x1xf32, #tpu.memory_space<smem>>
    %7 = vector.broadcast %6 : f32 to vector<2x1xf32>
    %8 = arith.addf %5, %7 : vector<2x1xf32>
    %9 = arith.negf %8 : vector<2x1xf32>
    %10 = math.exp %9 : vector<2x1xf32>
    %cst_5 = arith.constant 1.000000e+00 : f32
    %11 = vector.broadcast %cst_5 : f32 to vector<2x1xf32>
    %12 = arith.addf %11, %10 : vector<2x1xf32>
    %13 = arith.divf %11, %12 : vector<2x1xf32>
    %c0_6 = arith.constant 0 : index
    %c0_7 = arith.constant 0 : index
    %14 = vector.load %arg3[%c0_6, %c0_7] : memref<2x1xf32, #tpu.memory_space<vmem>>, vector<2x1xf32>
    tpu.vector_store %arg3[%c0_6, %c0_7], %13 {strides = array<i32>} : memref<2x1xf32, #tpu.memory_space<vmem>>, vector<2x1xf32>,
    return
  }
}

</mosaic_0001>

<llo_original>
// kernel: tpu_custom_call.1
$region0: #{tpu_custom_call.1}
  #allocation0 [shape = 'u32[]', space=smem, size = 0x4, offset = 0x4, fixed_abs, tag = 'smem constant byte address 0x4 - core index']
  #allocation1 [shape = 'u32[144,128]{1,0:T(1,128)}', space=vmem, size = 0x12000, scoped, tag = 'internal scratch']
  #allocation2 [shape = 'f32[1,1]{1,0:T(1,128)S(6)}', space=smem, size = 0x200, scoped, tag = 'scoped memory for tpu_custom_call.1']
  %s0 = inlined_call_operand.<no memory space> [shape: f32[1,1], index: 0, kind: input, shape index: {}]
  %s1 = inlined_call_operand.hbm [shape: f32[2,1024], index: 1, kind: input, shape index: {}]
  %s2 = inlined_call_operand.hbm [shape: f32[1,1024], index: 2, kind: input, shape index: {}]
  %s3 = inlined_call_operand.vmem [shape: f32[2,1], index: 3, kind: output, shape index: {}]
  %s4 = sld [smem:[#allocation0]]
  $region30: #{tpu_custom_call.1} parent=0
    _
  %s6 = ssub.s32 1, %s4
  %s7 = scalar_select 0, %s6, %s4
  %8 = sst [smem:[#allocation2]] %s0
  $region1: #{tpu_custom_call.1} parent=0
    #allocation3 [shape = 'u8[8192]{0}', space=vmem, size = 0x2000, scoped, tag = 'input window, operand 1, single buffered']
    #allocation4 [shape = 's32[1]{0}', space=sflag, size = 0x4, scoped, tag = 'scoped memory for tpu_custom_call.1']
    #allocation5 [shape = 'u8[4096]{0}', space=vmem, size = 0x1000, scoped, tag = 'input window, operand 2, single buffered']
    #allocation6 [shape = 's32[1]{0}', space=sflag, size = 0x4, scoped, tag = 'scoped memory for tpu_custom_call.1']
    %9 = vsyncpa [#allocation4], 0
    %10 = vsyncpa [#allocation6], 0
    // Predicated region
    $region2: #{tpu_custom_call.1} parent=1 // pred_check
      _
    $region3: #{tpu_custom_call.1} parent=1 // pred_check_branch
      %12 = sbr.rel (0) target = $region5
    $region4: #{tpu_custom_call.1} parent=1 // pred_region
      _
    $region5: #{tpu_custom_call.1} parent=1 // pred_fallthru
      _
    // Predicated region
    $region6: #{tpu_custom_call.1} parent=1 // pred_check
      _
    $region7: #{tpu_custom_call.1} parent=1 // pred_check_branch
      %14 = sbr.rel (0) target = $region9
    $region8: #{tpu_custom_call.1} parent=1 // pred_region
      %s16 = ssub.s32 256, 256
      %17 = vsyncadd [#allocation4], %s16
      %s19 = sshll.u32 [#allocation3], 4
      %s20 = int_to_ptr.vmem [resolvable:$true] %s19
      %22 = dma.hbm_to_vmem [thread:$0]  %s1, 256, %s20, [#allocation4]
    $region9: #{tpu_custom_call.1} parent=1 // pred_fallthru
      _
    // Predicated region
    $region10: #{tpu_custom_call.1} parent=1 // pred_check
      _
    $region11: #{tpu_custom_call.1} parent=1 // pred_check_branch
      %24 = sbr.rel (0) target = $region13
    $region12: #{tpu_custom_call.1} parent=1 // pred_region
      %s26 = ssub.s32 128, 128
      %27 = vsyncadd [#allocation6], %s26
      %s29 = sshll.u32 [#allocation5], 4
      %s30 = int_to_ptr.vmem [resolvable:$true] %s29
      %32 = dma.hbm_to_vmem [thread:$0]  %s2, 128, %s30, [#allocation6]
    $region13: #{tpu_custom_call.1} parent=1 // pred_fallthru
      _
    // Predicated region
    $region14: #{tpu_custom_call.1} parent=1 // pred_check
      _
    $region15: #{tpu_custom_call.1} parent=1 // pred_check_branch
      %34 = sbr.rel (0) target = $region17
    $region16: #{tpu_custom_call.1} parent=1 // pred_region
      %35 = dma.done [#allocation4], 256
    $region17: #{tpu_custom_call.1} parent=1 // pred_fallthru
      _
    // Predicated region
    $region18: #{tpu_custom_call.1} parent=1 // pred_check
      _
    $region19: #{tpu_custom_call.1} parent=1 // pred_check_branch
      %37 = sbr.rel (0) target = $region21
    $region20: #{tpu_custom_call.1} parent=1 // pred_region
      %38 = dma.done [#allocation6], 128
    $region21: #{tpu_custom_call.1} parent=1 // pred_fallthru
      _
    %v39 = vld [vmem:[#allocation3] sm:$0xff]
    %v40 = vld [vmem:[#allocation3 + $0x8] sm:$0xff]
    %v41 = vld [vmem:[#allocation5] sm:$0xff]
    %v43 = vlaneseq
    %v44 = vshrl.u32 %v43, 7
    %v45 = vsub.s32 0, %v44
    %v46 = vrot.slane %v41, %v45
    %v47 = vlaneseq
    %v48 = vshrl.u32 %v47, 7
    %v49 = vsub.s32 1, %v48
    %v50 = vrot.slane %v41, %v49
    %v51 = vlaneseq
    %v52 = vshrl.u32 %v51, 7
    %v53 = vsub.s32 2, %v52
    %v54 = vrot.slane %v41, %v53
    %v55 = vlaneseq
    %v56 = vshrl.u32 %v55, 7
    %v57 = vsub.s32 3, %v56
    %v58 = vrot.slane %v41, %v57
    %v59 = vlaneseq
    %v60 = vshrl.u32 %v59, 7
    %v61 = vsub.s32 4, %v60
    %v62 = vrot.slane %v41, %v61
    %v63 = vlaneseq
    %v64 = vshrl.u32 %v63, 7
    %v65 = vsub.s32 5, %v64
    %v66 = vrot.slane %v41, %v65
    %v67 = vlaneseq
    %v68 = vshrl.u32 %v67, 7
    %v69 = vsub.s32 6, %v68
    %v70 = vrot.slane %v41, %v69
    %v71 = vlaneseq
    %v72 = vshrl.u32 %v71, 7
    %v73 = vsub.s32 7, %v72
    %v74 = vrot.slane %v41, %v73
    %v75 = vcombine.low %v46, %v50
    %v76 = vcombine.low %v54, %v58
    %v78 = vunpack.c.l.s4 1983009808
    %v79 = vunpack.c.0.s8 %v78
    %v80 = vlaneseq
    %v81 = vshrl.u32 %v80, 7
    %v82 = vsub.s32 %v79, %v81
    %v83 = vrot.slane %v75, %v82
    %v85 = vunpack.c.l.s4 1983009808
    %v86 = vunpack.c.0.s8 %v85
    %v87 = vlaneseq
    %v88 = vshrl.u32 %v87, 7
    %v89 = vsub.s32 %v86, %v88
    %v90 = vrot.slane %v76, %v89
    %v91 = vcombine.low %v83, %v90
    %v92 = vcombine.low %v62, %v66
    %v93 = vcombine.low %v70, %v74
    %v95 = vunpack.c.l.s4 1983009808
    %v96 = vunpack.c.0.s8 %v95
    %v97 = vlaneseq
    %v98 = vshrl.u32 %v97, 7
    %v99 = vsub.s32 %v96, %v98
    %v100 = vrot.slane %v92, %v99
    %v102 = vunpack.c.l.s4 1983009808
    %v103 = vunpack.c.0.s8 %v102
    %v104 = vlaneseq
    %v105 = vshrl.u32 %v104, 7
    %v106 = vsub.s32 %v103, %v105
    %v107 = vrot.slane %v93, %v106
    %v108 = vcombine.low %v100, %v107
    %v111 = vmul.f32 %v39, %v91
    %v112 = vmul.f32 %v40, %v108
    %v115 = vcombine.high %v111, %v111
    %v117 = vunpack.c.l.s4 1983009808
    %v118 = vunpack.c.0.s8 %v117
    %v119 = vlaneseq
    %v120 = vshrl.u32 %v119, 7
    %v121 = vsub.s32 %v118, %v120
    %v122 = vrot.slane %v111, %v121
    %v124 = vunpack.c.l.s4 1983009808
    %v125 = vunpack.c.0.s8 %v124
    %v126 = vlaneseq
    %v127 = vshrl.u32 %v126, 7
    %v128 = vsub.s32 %v125, %v127
    %v129 = vrot.slane %v115, %v128
    %v130 = vcombine.high %v122, %v122
    %v131 = vcombine.high %v129, %v129
    %v132 = vcombine.high %v112, %v112
    %v134 = vunpack.c.l.s4 1983009808
    %v135 = vunpack.c.0.s8 %v134
    %v136 = vlaneseq
    %v137 = vshrl.u32 %v136, 7
    %v138 = vsub.s32 %v135, %v137
    %v139 = vrot.slane %v112, %v138
    %v141 = vunpack.c.l.s4 1983009808
    %v142 = vunpack.c.0.s8 %v141
    %v143 = vlaneseq
    %v144 = vshrl.u32 %v143, 7
    %v145 = vsub.s32 %v142, %v144
    %v146 = vrot.slane %v132, %v145
    %v147 = vcombine.high %v139, %v139
    %v148 = vcombine.high %v146, %v146
    %vm157 = vcmask 1041408
    %v158 = vsel %vm157, %v122, 0.0
    %v159 = vsel %vm157, %v130, 0.0
    %v160 = vadd.f32 %v158, %v159
    %v161 = vsel %vm157, %v129, 0.0
    %v162 = vadd.f32 %v160, %v161
    %v163 = vsel %vm157, %v131, 0.0
    %v164 = vadd.f32 %v162, %v163
    %v165 = vsel %vm157, %v139, 0.0
    %v166 = vadd.f32 %v164, %v165
    %v167 = vsel %vm157, %v147, 0.0
    %v168 = vadd.f32 %v166, %v167
    %v169 = vsel %vm157, %v146, 0.0
    %v170 = vadd.f32 %v168, %v169
    %v171 = vsel %vm157, %v148, 0.0
    %v172 = vadd.f32 %v170, %v171
    %173 = vadd.xlane.f32.xlu0 %v172
    %v174 = vpop.xlane.xlu0 %173
    %s175 = sld [smem:[#allocation2]]
    %v176 = vstv %s175
    %v177 = vadd.f32 %v174, %v176
    %v178 = vxor.u32 %v177, 2147483648
    %v179 = vmul.f32 %v178, 1.442695
    %v180 = vpow.pop %v179
    %v181 = vadd.f32 %v180, 1.0
    %v182 = vrcp.pop %v181
    %v183 = vmul.f32 1.0, %v182
    %vm184 = vcmask 1024
    %185 = vst.msk [vmem:[%s3] sm:$0x3] %vm184, %v183
    // Predicated region
    $region22: #{tpu_custom_call.1} parent=1 // pred_check
      _
    $region23: #{tpu_custom_call.1} parent=1 // pred_check_branch
      %187 = sbr.rel (0) target = $region25
    $region24: #{tpu_custom_call.1} parent=1 // pred_region
      _
    $region25: #{tpu_custom_call.1} parent=1 // pred_fallthru
      _
    // Predicated region
    $region26: #{tpu_custom_call.1} parent=1 // pred_check
      _
    $region27: #{tpu_custom_call.1} parent=1 // pred_check_branch
      %189 = sbr.rel (0) target = $region29
    $region28: #{tpu_custom_call.1} parent=1 // pred_region
      _
    $region29: #{tpu_custom_call.1} parent=1 // pred_fallthru
      _
    %190 = vsyncpa [#allocation4], 1
    %191 = vsyncpa [#allocation6], 1

</llo_original>
